<compile_context>
chip_gen: v5e
topology: v5e:2x2
jax: 0.10.0
libtpu: 0.0.40
codegen_flags: <defaults>
</compile_context>

<pallas_src>
import functools

import jax
import jax.numpy as jnp
from jax.experimental import pallas as pl
from jax.experimental.pallas import tpu as pltpu

KER_SZ = 3
_LANE = 128


def _round_up(x, m):
    return (x + m - 1) // m * m


def _vmem_capacity_bytes():
    """Physical VMEM of the local TPU generation (conservative fallback = v7x's 64 MiB)."""
    try:
        info = pltpu.get_tpu_info()
        cap = int(getattr(info, "vmem_capacity_bytes", 0))
        if cap > 0:
            return cap
    except Exception:
        pass
    return 64 << 20


def _fold_matmul_kernel(p_ref, w_ref, o_ref, *, apply_relu):
    """Small-Cin path: wrapper-side im2col -> one MXU matmul per (batch, row-tile, co-tile).

    p_ref : (1, tile_h, W, 9*Cin)   pre-im2col'd patches (VMEM)
    w_ref : (9*Cin, tile_co)        conv weights, tap-major / channel-minor (VMEM, resident)
    o_ref : (1, tile_h, W, tile_co) output tile (VMEM)
    """
    _, th, wd, tco = o_ref.shape
    kc = w_ref.shape[0]
    lhs = p_ref[0].reshape(th * wd, kc)          # minor dim unchanged -> cheap row merge
    acc = jnp.dot(lhs, w_ref[...], preferred_element_type=jnp.float32)
    if apply_relu:
        acc = jnp.maximum(acc, 0.0)
    o_ref[0] = acc.reshape(th, wd, tco).astype(o_ref.dtype)


def _per_tap_kernel(x_ref, w_ref, o_ref, *, apply_relu):
    """Large-Cin path: 9 per-tap matmuls over a halo'd row window.

    x_ref : (1, tile_h + 2, W + 2, Cin)  zero-padded, halo'd input window (VMEM)
    w_ref : (9*Cin, tile_co)             conv weights, tap-major / channel-minor (VMEM, resident)
    o_ref : (1, tile_h, W, tile_co)      output tile (VMEM)
    """
    _, th, wd, tco = o_ref.shape
    cin = x_ref.shape[-1]
    x = x_ref[0]                                  # (tile_h + 2, W + 2, Cin)
    acc = None
    for dy in range(KER_SZ):
        xs = x[dy:dy + th]                        # H is the untiled outer axis -> cheap slice
        for dx in range(KER_SZ):
            # TODO(synk): a rank-3 lax.dot_general contracting the channel axis (no reshape)
            # would avoid the per-tap slice+reshape relayout; kept 2-D for lowering safety.
            xt = xs[:, dx:dx + wd, :].reshape(th * wd, cin)
            r0 = (dy * KER_SZ + dx) * cin
            part = jnp.dot(xt, w_ref[r0:r0 + cin, :],
                           preferred_element_type=jnp.float32)
            acc = part if acc is None else acc + part
    if apply_relu:
        acc = jnp.maximum(acc, 0.0)
    o_ref[0] = acc.reshape(th, wd, tco).astype(o_ref.dtype)


def conv_layer_forward(x_nchw, weight_oihw, *, bn=False, rl=True, tile_h=None, out_dtype=None):
    """Equivalent of conv_layer.forward (3x3, stride=1, pad=1, bias=False; bn=False, rl=True)."""
    if bn:
        # TODO(synk): training-mode BatchNorm2d (batch statistics) not implemented in-kernel.
        raise NotImplementedError("conv_layer Pallas kernel only implements the bn=False path")

    n, cin, h, w = x_nchw.shape
    cout, cin_w, kh, kw = weight_oihw.shape
    assert (cin_w, kh, kw) == (cin, KER_SZ, KER_SZ), "only 3x3 / stride=1 / pad=1 supported"

    dtype = x_nchw.dtype
    out_dtype = dtype if out_dtype is None else out_dtype   # pass bf16 on v5e to halve store bytes
    itemsize = jnp.dtype(dtype).itemsize
    out_itemsize = jnp.dtype(out_dtype).itemsize
    sublane = {4: 8, 2: 16, 1: 32}.get(itemsize, 8)

    kc = KER_SZ * KER_SZ * cin
    cout_pad = _round_up(cout, _LANE)               # lane-dense stores, padding sliced off below

    # Cout tiling: one tile whenever it fits; otherwise tile with co as the OUTERMOST grid axis
    # so the weight block only changes at co boundaries (stays resident across the (b, row) loop).
    if cout_pad <= 512:
        tile_co = cout_pad
    else:
        tile_co = 256 if cout_pad % 256 == 0 else _LANE
    n_co = cout_pad // tile_co

    # Small Cin: im2col in the wrapper -> kernel is a single matmul (no in-kernel lane concat).
    fold = cin <= 16

    vmem_cap = _vmem_capacity_bytes()
    budget = (vmem_cap * 3) // 4                    # ~48 MiB on v7x, ~96 MiB on v5e/v6e

    def est_vmem(th):
        # Physically padded (sublane x lane) block footprints, double-buffered, + f32 temps.
        if fold:
            in_b = th * _round_up(w, sublane) * _round_up(kc, _LANE) * itemsize
            tmp_b = 0
        else:
            in_b = (th + 2) * _round_up(w + 2, sublane) * _round_up(cin, _LANE) * itemsize
            tmp_b = 2 * th * _round_up(w, sublane) * _round_up(cin, _LANE) * 4   # per-tap slices
        out_b = th * _round_up(w, sublane) * tile_co * out_itemsize
        w_b = _round_up(kc, sublane) * tile_co * itemsize
        acc_b = th * _round_up(w, sublane) * tile_co * 4
        return 2 * (in_b + out_b + w_b) + acc_b + tmp_b + (4 << 20)

    if tile_h is None:
        if h <= 8:
            tile_h = h
        else:
            cands = [t for t in (64, 48, 40, 32, 24, 16, 8) if t <= h]
            fitting = [t for t in cands if est_vmem(t) <= budget]
            # Keep >= 2 row tiles so megacore / the software pipeline has work to split.
            multi = [t for t in fitting if pl.cdiv(h, t) >= 2]
            tile_h = multi[0] if multi else (fitting[0] if fitting else 8)
    h_pad = _round_up(h, tile_h)
    n_h = h_pad // tile_h

    vmem_limit = int(min(max(est_vmem(tile_h), 32 << 20), vmem_cap))

    # --- interface glue (one HBM pass each) ---
    # TODO(synk): expose an NHWC / padded-Cout fast path so back-to-back conv_layers skip the
    # NCHW<->NHWC transposes, the pad and the channel slice at every layer.
    x_nhwc = jnp.transpose(x_nchw, (0, 2, 3, 1))

    # Weight: OIHW -> (kh, kw, Cin, Cout_pad) -> (n_co, 9*Cin, tile_co), tap-major/channel-minor.
    # NOTE: cast to the activation dtype (bf16 activations => bf16 weights on the MXU).
    w_hwio = jnp.transpose(weight_oihw, (2, 3, 1, 0)).astype(dtype)
    w_hwio = jnp.pad(w_hwio, ((0, 0), (0, 0), (0, 0), (0, cout_pad - cout)))
    w_blk = w_hwio.reshape(kc, n_co, tile_co).transpose(1, 0, 2)

    grid = (n_co, n, n_h)
    # Weight block index depends only on the outermost axis -> never re-DMA'd inside (b, i) loop.
    w_spec = pl.BlockSpec((None, kc, tile_co), lambda co, b, i: (co, 0, 0))
    out_spec = pl.BlockSpec((1, tile_h, w, tile_co), lambda co, b, i: (b, i, 0, co))

    if fold:
        x_sp = jnp.pad(x_nhwc, ((0, 0), (1, 1), (1, 1), (0, 0)))
        # Wrapper-side im2col: (N, H, W, 9*Cin) with (dy, dx, ci) channel order matching w_blk.
        patches = jnp.concatenate(
            [x_sp[:, dy:dy + h, dx:dx + w, :] for dy in range(KER_SZ) for dx in range(KER_SZ)],
            axis=-1)
        if h_pad > h:
            patches = jnp.pad(patches, ((0, 0), (0, h_pad - h), (0, 0), (0, 0)))
        in_arr = patches
        in_spec = pl.BlockSpec((1, tile_h, w, kc), lambda co, b, i: (b, i, 0, 0))
        kernel = functools.partial(_fold_matmul_kernel, apply_relu=rl)
    else:
        # Zero pad: 1 halo row/col each side plus extra bottom rows up to h_pad.
        x_sp = jnp.pad(x_nhwc, ((0, 0), (1, 1 + h_pad - h), (1, 1), (0, 0)))
        in_arr = x_sp
        # Element-indexed H: consecutive row blocks overlap by the 2-row conv halo.
        in_spec = pl.BlockSpec((1, pl.Element(tile_h + 2), w + 2, cin),
                               lambda co, b, i: (b, i * tile_h, 0, 0))
        kernel = functools.partial(_per_tap_kernel, apply_relu=rl)

    out = pl.pallas_call(
        kernel,
        out_shape=jax.ShapeDtypeStruct((n, h_pad, w, cout_pad), out_dtype),
        grid=grid,
        in_specs=[in_spec, w_spec],
        out_specs=out_spec,
        compiler_params=pltpu.CompilerParams(
            dimension_semantics=("parallel", "parallel", "parallel"),
            vmem_limit_bytes=vmem_limit,
        ),
    )(in_arr, w_blk)

    # Drop H / channel padding and return NCHW to match the PyTorch module.
    out = out[:, :h, :, :cout]
    return jnp.transpose(out, (0, 3, 1, 2))


if __name__ == "__main__":
    key = jax.random.PRNGKey(0)
    k1, k2, k3, k4 = jax.random.split(key, 4)

    def ref_conv_relu(x, wgt):
        out = jax.lax.conv_general_dilated(
            x, wgt, window_strides=(1, 1), padding=((1, 1), (1, 1)),
            dimension_numbers=("NCHW", "OIHW", "NCHW"))
        return jnp.maximum(out, 0.0)

    # Case 1: small Cin -> wrapper-im2col / single-matmul path (also exercises Cout lane padding
    # and multiple row tiles: tile_h=8 over H=16).
    N, Cin, Cout, H, W = 2, 4, 8, 16, 16
    x1 = jax.random.normal(k1, (N, Cin, H, W), dtype=jnp.float32)
    w1 = jax.random.normal(k2, (Cout, Cin, KER_SZ, KER_SZ), dtype=jnp.float32)
    w1 = w1 * (2.0 / (Cin * KER_SZ * KER_SZ)) ** 0.5
    out1 = jax.block_until_ready(conv_layer_forward(x1, w1, bn=False, rl=True))
    ref1 = ref_conv_relu(x1, w1)
    assert out1.shape == ref1.shape
    assert jnp.allclose(out1, ref1, atol=1e-3, rtol=1e-3)

    # Case 2: larger Cin -> per-tap halo path, with H not divisible by the row tile
    # (exercises the Element-indexed overlapping blocks and the H padding logic).
    N, Cin, Cout, H, W = 1, 32, 16, 12, 16
    x2 = jax.random.normal(k3, (N, Cin, H, W), dtype=jnp.float32)
    w2 = jax.random.normal(k4, (Cout, Cin, KER_SZ, KER_SZ), dtype=jnp.float32)
    w2 = w2 * (2.0 / (Cin * KER_SZ * KER_SZ)) ** 0.5
    out2 = jax.block_until_ready(conv_layer_forward(x2, w2, bn=False, rl=True))
    ref2 = ref_conv_relu(x2, w2)
    assert out2.shape == ref2.shape
    assert jnp.allclose(out2, ref2, atol=2e-3, rtol=2e-3)

    print("KERNEL_OK")
</pallas_src>

<mosaic_0001>
module attributes {stable_mosaic.version = 11 : i64} {
  func.func @_fold_matmul_kernel(%arg0: i32, %arg1: i32, %arg2: i32, %arg3: memref<1x8x16x36xf32, #tpu.memory_space<vmem>>, %arg4: memref<1x36x128xf32, #tpu.memory_space<vmem>>, %arg5: memref<1x8x16x128xf32, #tpu.memory_space<vmem>>) attributes {dimension_semantics = [#tpu.dimension_semantics<parallel>, #tpu.dimension_semantics<parallel>, #tpu.dimension_semantics<parallel>], iteration_bounds = array<i64: 1, 2, 2>, scalar_prefetch = 0 : i64, scratch_operands = 0 : i64, tpu.core_type = #tpu.core_type<tc>, window_params = [{transform_indices = @transform_0, window_bounds = array<i64: 1, 8, 16, 36>}, {transform_indices = @transform_1, window_bounds = array<i64: 1, 36, 128>}, {transform_indices = @transform_2, window_bounds = array<i64: 1, 8, 16, 128>}]} {
    %c0 = arith.constant 0 : index
    %c0_0 = arith.constant 0 : index
    %c0_1 = arith.constant 0 : index
    %c0_2 = arith.constant 0 : index
    %0 = vector.load %arg3[%c0, %c0_0, %c0_1, %c0_2] : memref<1x8x16x36xf32, #tpu.memory_space<vmem>>, vector<1x8x16x36xf32>
    %1 = vector.shape_cast %0 : vector<1x8x16x36xf32> to vector<8x16x36xf32>
    %2 = vector.shape_cast %1 : vector<8x16x36xf32> to vector<128x36xf32>
    %c0_3 = arith.constant 0 : index
    %c0_4 = arith.constant 0 : index
    %c0_5 = arith.constant 0 : index
    %3 = vector.load %arg4[%c0_3, %c0_4, %c0_5] : memref<1x36x128xf32, #tpu.memory_space<vmem>>, vector<1x36x128xf32>
    %4 = vector.shape_cast %3 : vector<1x36x128xf32> to vector<36x128xf32>
    %cst = arith.constant dense<0.000000e+00> : vector<128x128xf32>
    %5 = tpu.matmul %2, %4, %cst {dimension_numbers = #tpu.dot_dimension_numbers<[1], [0], [0], [1], [0, 0, 1, 1], [], []>} : vector<128x36xf32>, vector<36x128xf32>, vector<128x128xf32> -> vector<128x128xf32>
    %cst_6 = arith.constant 0.000000e+00 : f32
    %6 = vector.broadcast %cst_6 : f32 to vector<128x128xf32>
    %7 = arith.maximumf %5, %6 : vector<128x128xf32>
    %8 = vector.shape_cast %7 : vector<128x128xf32> to vector<8x16x128xf32>
    %c0_7 = arith.constant 0 : index
    %c0_8 = arith.constant 0 : index
    %c0_9 = arith.constant 0 : index
    %c0_10 = arith.constant 0 : index
    %9 = vector.load %arg5[%c0_7, %c0_8, %c0_9, %c0_10] : memref<1x8x16x128xf32, #tpu.memory_space<vmem>>, vector<1x8x16x128xf32>
    %10 = vector.shape_cast %9 : vector<1x8x16x128xf32> to vector<8x16x128xf32>
    %11 = vector.shape_cast %8 : vector<8x16x128xf32> to vector<1x8x16x128xf32>
    tpu.vector_store %arg5[%c0_7, %c0_8, %c0_9, %c0_10], %11 {strides = array<i32>} : memref<1x8x16x128xf32, #tpu.memory_space<vmem>>, vector<1x8x16x128xf32>,
    return
  }
  func.func @transform_0(%arg0: i32, %arg1: i32, %arg2: i32) -> (i32, i32, i32, i32) {
    %c0_i32 = arith.constant 0 : i32
    %c0_i32_0 = arith.constant 0 : i32
    %c0_i32_1 = arith.constant 0 : i32
    return %arg1, %arg2, %c0_i32, %c0_i32_0 : i32, i32, i32, i32
  }
  func.func @transform_1(%arg0: i32, %arg1: i32, %arg2: i32) -> (i32, i32, i32) {
    %c0_i32 = arith.constant 0 : i32
    %c0_i32_0 = arith.constant 0 : i32
    %c0_i32_1 = arith.constant 0 : i32
    return %arg0, %c0_i32, %c0_i32_0 : i32, i32, i32
  }
  func.func @transform_2(%arg0: i32, %arg1: i32, %arg2: i32) -> (i32, i32, i32, i32) {
    %c0_i32 = arith.constant 0 : i32
    %c0_i32_0 = arith.constant 0 : i32
    return %arg1, %arg2, %c0_i32, %arg0 : i32, i32, i32, i32
  }
}

</mosaic_0001>

<llo_original>
// kernel: tpu_custom_call.1
$region0: #{tpu_custom_call.1}
  #allocation0 [shape = 'u32[]', space=smem, size = 0x4, offset = 0x4, fixed_abs, tag = 'smem constant byte address 0x4 - core index']
  #allocation1 [shape = 'u32[72,128]{1,0:T(1,128)}', space=vmem, size = 0x9000, scoped, tag = 'internal scratch']
  %s0 = inlined_call_operand.hbm [shape: f32[2,16,16,36], index: 0, kind: input, shape index: {}]
  %s1 = inlined_call_operand.vmem [shape: f32[1,36,128], index: 1, kind: input, shape index: {}]
  %s2 = inlined_call_operand.hbm [shape: f32[2,16,16,128], index: 2, kind: output, shape index: {}]
  %s3 = sld [smem:[#allocation0]]
  $region45: #{tpu_custom_call.1} parent=0
    _
  %s5 = ssub.s32 1, %s3
  %s6 = scalar_select 0, %s5, %s3
  $region1: #{tpu_custom_call.1} parent=0
    #allocation2 [shape = 'u8[131072]{0}', space=vmem, size = 0x20000, scoped, tag = 'input window, operand 0']
    #allocation3 [shape = 's32[2]{0}', space=sflag, size = 0x8, scoped, tag = 'scoped memory for tpu_custom_call.1']
    #allocation4 [shape = 's32[2]{0}', space=sflag, size = 0x8, scoped, tag = 'scoped memory for tpu_custom_call.1']
    #allocation5 [shape = 'u8[131072]{0}', space=vmem, size = 0x20000, scoped, tag = 'output window, operand 0']
    %7 = vsyncpa [#allocation3], 0
    %s8 = scalar_lea.sflag [#allocation3], 1
    %9 = vsyncpa %s8, 0
    %10 = vsyncpa [#allocation4], 0
    %s11 = scalar_lea.sflag [#allocation4], 1
    %12 = vsyncpa %s11, 0
    loop: start=0, step=1, limit=6
    $region2: #{tpu_custom_call.1} parent=1 // loop_pre_header
      _
    $region3: #{tpu_custom_call.1} parent=1 // loop_header
      %s14 = sphi 0, %s18
      %p15 = scmp.ge.s32.totalorder %s14, 6
      %s21 = sphi 0, %s40
      %s22 = sphi 0, %s36
      %s23 = sphi 0, %s32
      %s24 = sphi 0, %s21
      %s25 = sphi 0, %s22
      %s26 = sphi 0, %s23
      %s27 = sphi 0, %s24
      %s28 = sphi 0, %s25
      %s29 = sphi 0, %s26
      %s45 = sphi 0, %s47
      %s48 = sphi 0, %s45
      %s49 = sphi 0, %s48
      %s65 = sphi 0, %s49
      %s71 = sphi 0, %s73
      %s74 = sphi 0, %s71
      %s75 = sphi 0, %s74
      %s91 = sphi 0, %s75
      %s101 = sphi 0, %s103
      %s104 = sphi 0, %s101
      %s105 = sphi 0, %s104
      %s121 = sphi 0, %s105
    $region4: #{tpu_custom_call.1} parent=1 // loop_header_branch
      %17 = sbr.rel (%p15) target = $region8
    $region5: #{tpu_custom_call.1} parent=1 // loop_body
      %s19 = ssub.s32 %s14, 1
      %s20 = ssub.s32 %s14, 2
      %s30 = sadd.s32 1, %s23
      %p31 = scmp.ge.s32.totalorder %s30, 2
      %s32 = scalar_select %p31, 0, %s30
      %s33 = sadd.s32 1, %s22
      %s34 = scalar_select %p31, %s33, %s22
      %p35 = scmp.ge.s32.totalorder %s34, 2
      %s36 = scalar_select %p35, 0, %s34
      %s37 = sadd.s32 1, %s21
      %s38 = scalar_select %p35, %s37, %s21
      %p39 = scmp.ge.s32.totalorder %s38, 1
      %s40 = scalar_select %p39, 0, %s38
      %s41 = ssub.s32 %s22, %s36
      %s42 = ssub.s32 %s23, %s32
      %s43 = sor.u32 %s41, %s42
      %p44 = scmp.eq.s32.totalorder %s43, 0
      %s46 = sadd.s32 %s45, 1
      %s47 = scalar_select %p44, %s45, %s46
      %p50 = pneg %p44
      %p51 = scmp.eq.s32.totalorder %s14, 3
      %p52 = por %p50, %p51
      %p53 = scmp.ne.s32.totalorder %s45, %s48
      %p54 = scmp.eq.s32.totalorder %s14, 0
      %p55 = por %p53, %p54
      %p56 = scmp.ne.s32.totalorder %s45, %s48
      %p57 = scmp.eq.s32.totalorder %s19, 3
      %p58 = por %p56, %p57
      %p59 = scmp.ne.s32.totalorder %s48, %s49
      %p60 = scmp.eq.s32.totalorder %s19, 0
      %p61 = por %p59, %p60
      %p62 = scmp.ne.s32.totalorder %s48, %s49
      %p63 = scmp.eq.s32.totalorder %s20, 3
      %p64 = por %p62, %p63
      %p66 = scmp.ne.s32.totalorder %s49, %s65
      %p67 = scmp.eq.s32.totalorder %s20, 0
      %p68 = por %p66, %p67
      %s69 = ssub.s32 %s21, %s40
      %p70 = scmp.eq.s32.totalorder %s69, 0
      %s72 = sadd.s32 %s71, 1
      %s73 = scalar_select %p70, %s71, %s72
      %p76 = pneg %p70
      %p77 = scmp.eq.s32.totalorder %s14, 3
      %p78 = por %p76, %p77
      %p79 = scmp.ne.s32.totalorder %s71, %s74
      %p80 = scmp.eq.s32.totalorder %s14, 0
      %p81 = por %p79, %p80
      %p82 = scmp.ne.s32.totalorder %s71, %s74
      %p83 = scmp.eq.s32.totalorder %s19, 3
      %p84 = por %p82, %p83
      %p85 = scmp.ne.s32.totalorder %s74, %s75
      %p86 = scmp.eq.s32.totalorder %s19, 0
      %p87 = por %p85, %p86
      %p88 = scmp.ne.s32.totalorder %s74, %s75
      %p89 = scmp.eq.s32.totalorder %s20, 3
      %p90 = por %p88, %p89
      %p92 = scmp.ne.s32.totalorder %s75, %s91
      %p93 = scmp.eq.s32.totalorder %s20, 0
      %p94 = por %p92, %p93
      %s95 = ssub.s32 %s22, %s36
      %s96 = ssub.s32 %s23, %s32
      %s97 = sor.u32 %s95, %s96
      %s98 = ssub.s32 %s21, %s40
      %s99 = sor.u32 %s97, %s98
      %p100 = scmp.eq.s32.totalorder %s99, 0
      %s102 = sadd.s32 %s101, 1
      %s103 = scalar_select %p100, %s101, %s102
      %p106 = pneg %p100
      %p107 = scmp.eq.s32.totalorder %s14, 3
      %p108 = por %p106, %p107
      %p109 = scmp.ne.s32.totalorder %s101, %s104
      %p110 = scmp.eq.s32.totalorder %s14, 0
      %p111 = por %p109, %p110
      %p112 = scmp.ne.s32.totalorder %s101, %s104
      %p113 = scmp.eq.s32.totalorder %s19, 3
      %p114 = por %p112, %p113
      %p115 = scmp.ne.s32.totalorder %s104, %s105
      %p116 = scmp.eq.s32.totalorder %s19, 0
      %p117 = por %p115, %p116
      %p118 = scmp.ne.s32.totalorder %s104, %s105
      %p119 = scmp.eq.s32.totalorder %s20, 3
      %p120 = por %p118, %p119
      %p122 = scmp.ne.s32.totalorder %s105, %s121
      %p123 = scmp.eq.s32.totalorder %s20, 0
      %p124 = por %p122, %p123
      %p125 = scmp.le.s32.totalorder 1, %s14
      %p126 = scmp.lt.s32.totalorder %s14, 5
      %p127 = pnand %p125, %p126
      %p128 = pneg %p127
      // Predicated region
      $region9: #{tpu_custom_call.1} parent=5 // pred_check
        _
      $region10: #{tpu_custom_call.1} parent=5 // pred_check_branch
        %130 = sbr.rel (%p127) target = $region12
      $region11: #{tpu_custom_call.1} parent=5 // pred_region
        %s131 = ssub.s32 %s14, 1
        // Predicated region
        $region13: #{tpu_custom_call.1} parent=11 // pred_check
          %p132 = pneg %p87
        $region14: #{tpu_custom_call.1} parent=11 // pred_check_branch
          %134 = sbr.rel (%p132) target = $region16
        $region15: #{tpu_custom_call.1} parent=11 // pred_region
          %p135 = scmp.lt.s32.totalorder %s24, 0
          %s136 = scalar_select %p135, %s24, 0
          %s137 = smul.addr %s136, 5
          %s138 = smul.addr %s137, 8
          %s139 = scalar_lea.vmem %s1, %s138
        $region16: #{tpu_custom_call.1} parent=11 // pred_fallthru
          _
      $region12: #{tpu_custom_call.1} parent=5 // pred_fallthru
        _
      %p140 = scmp.lt.s32.totalorder %s14, 4
      // Predicated region
      $region17: #{tpu_custom_call.1} parent=5 // pred_check
        %p141 = pneg %p140
      $region18: #{tpu_custom_call.1} parent=5 // pred_check_branch
        %143 = sbr.rel (%p141) target = $region20
      $region19: #{tpu_custom_call.1} parent=5 // pred_region
        // Predicated region
        $region21: #{tpu_custom_call.1} parent=19 // pred_check
          %p144 = pneg %p55
        $region22: #{tpu_custom_call.1} parent=19 // pred_check_branch
          %146 = sbr.rel (%p144) target = $region24
        $region23: #{tpu_custom_call.1} parent=19 // pred_region
          %s147 = sand.u32 %s45, 1
          %s148 = scalar_lea.sflag [#allocation3], %s147
          %s149 = sand.u32 %s45, 1
          %s150 = smul.addr %s149, 128
          %s151 = scalar_lea.vmem [#allocation2], %s150
          %s152 = smul.u32 8, %s23
          %154 = vsyncadd %s148, 0
          %s155 = smul.addr %s152, 2
          %s156 = smul.addr %s22, 32
          %s157 = sadd.s32 %s155, %s156
          %s158 = smul.addr %s157, 8
          %s159 = scalar_lea.hbm %s0, %s158
          %s160 = sshll.u32 %s159, 4
          %s161 = int_to_ptr.hbm [resolvable:$true] %s160
          %s162 = sshll.u32 %s151, 4
          %s163 = int_to_ptr.vmem [resolvable:$true] %s162
          %168 = dma.hbm_to_vmem [thread:$0]  %s161, 2048, %s163, %s148, 128, 128, 8
        $region24: #{tpu_custom_call.1} parent=19 // pred_fallthru
          _
      $region20: #{tpu_custom_call.1} parent=5 // pred_fallthru
        _
      %p169 = scmp.le.s32.totalorder 1, %s14
      %p170 = scmp.lt.s32.totalorder %s14, 5
      %p171 = pnand %p169, %p170
      %p172 = pneg %p171
      // Predicated region
      $region25: #{tpu_custom_call.1} parent=5 // pred_check
        _
      $region26: #{tpu_custom_call.1} parent=5 // pred_check_branch
        %174 = sbr.rel (%p171) target = $region28
      $region27: #{tpu_custom_call.1} parent=5 // pred_region
        %s175 = ssub.s32 %s14, 1
        %s176 = sand.u32 %s48, 1
        %s177 = scalar_lea.sflag [#allocation3], %s176
        %s178 = sand.u32 %s48, 1
        %s179 = smul.addr %s178, 128
        %s180 = scalar_lea.vmem [#allocation2], %s179
        // Predicated region
        $region29: #{tpu_custom_call.1} parent=27 // pred_check
          %p181 = pneg %p61
        $region30: #{tpu_custom_call.1} parent=27 // pred_check_branch
          %183 = sbr.rel (%p181) target = $region32
        $region31: #{tpu_custom_call.1} parent=27 // pred_region
          %185 = dma.done %s177, 2048
        $region32: #{tpu_custom_call.1} parent=27 // pred_fallthru
          _
        %s186 = sand.u32 %s48, 1
        %s187 = scalar_lea.sflag [#allocation3], %s186
        %s188 = sand.u32 %s48, 1
        %s189 = smul.addr %s188, 128
        %s190 = scalar_lea.vmem [#allocation2], %s189
        %p191 = pneg %p61
        %p192 = pneg %p58
        %p193 = scmp.lt.s32.totalorder %s24, 0
        %s194 = scalar_select %p193, %s24, 0
        %s195 = smul.addr %s194, 5
        %s196 = smul.addr %s195, 8
        %s197 = scalar_lea.vmem %s1, %s196
        %p198 = pneg %p87
        %p199 = pneg %p84
        %p200 = pneg %p117
        %p201 = pneg %p114
        %s202 = sand.u32 %s104, 1
        %s203 = scalar_lea.sflag [#allocation4], %s202
        %s204 = sand.u32 %s104, 1
        %s205 = smul.addr %s204, 128
        %s206 = scalar_lea.vmem [#allocation5], %s205
        %s207 = smul.u32 8, %s26
        %p208 = scmp.lt.s32.totalorder %s24, 0
        %s209 = scalar_select %p208, %s24, 0
        %s210 = smul.addr %s209, 5
        %s211 = smul.addr %s210, 8
        %s212 = scalar_lea.vmem %s1, %s211
        %s213 = smul.u32 8, %s26
        %v214 = vld [vmem:[%s180] sm:$0xff]
        %v215 = vld [vmem:[%s180 + $0x8] sm:$0xff]
        %v216 = vld [vmem:[%s180 + $0x10] sm:$0xff]
        %v217 = vld [vmem:[%s180 + $0x18] sm:$0xff]
        %v218 = vld [vmem:[%s180 + $0x20] sm:$0xff]
        %v219 = vld [vmem:[%s180 + $0x28] sm:$0xff]
        %v220 = vld [vmem:[%s180 + $0x30] sm:$0xff]
        %v221 = vld [vmem:[%s180 + $0x38] sm:$0xff]
        %v222 = vld [vmem:[%s180 + $0x40] sm:$0xff]
        %v223 = vld [vmem:[%s180 + $0x48] sm:$0xff]
        %v224 = vld [vmem:[%s180 + $0x50] sm:$0xff]
        %v225 = vld [vmem:[%s180 + $0x58] sm:$0xff]
        %v226 = vld [vmem:[%s180 + $0x60] sm:$0xff]
        %v227 = vld [vmem:[%s180 + $0x68] sm:$0xff]
        %v228 = vld [vmem:[%s180 + $0x70] sm:$0xff]
        %v229 = vld [vmem:[%s180 + $0x78] sm:$0xff]
        %v230 = vld [vmem:[%s212] sm:$0xff]
        %v231 = vld [vmem:[%s212 + $0x8] sm:$0xff]
        %v232 = vld [vmem:[%s212 + $0x10] sm:$0xff]
        %v233 = vld [vmem:[%s212 + $0x18] sm:$0xff]
        %v234 = vld [vmem:[%s212 + $0x20] sm:$0xf]
        %vm235 = vcmask 293888
        %v237 = vsel %vm235, %v214, 0
        %v240 = vsel %vm235, %v215, 0
        %v243 = vsel %vm235, %v216, 0
        %v246 = vsel %vm235, %v217, 0
        %v249 = vsel %vm235, %v218, 0
        %v252 = vsel %vm235, %v219, 0
        %v255 = vsel %vm235, %v220, 0
        %v258 = vsel %vm235, %v221, 0
        %v261 = vsel %vm235, %v222, 0
        %v264 = vsel %vm235, %v223, 0
        %v267 = vsel %vm235, %v224, 0
        %v270 = vsel %vm235, %v225, 0
        %v273 = vsel %vm235, %v226, 0
        %v276 = vsel %vm235, %v227, 0
        %v279 = vsel %vm235, %v228, 0
        %v282 = vsel %vm235, %v229, 0
        %vm284 = vcmask 1043456
        %v286 = vsel %vm284, %v234, 0
        %288 = vmatpush.msra.mxu0 0.0
        %289 = vmatpush.msra.mxu0 0.0
        %290 = vmatpush.msra.mxu0 0.0
        %291 = vmatpush.msra.mxu0 0.0
        %292 = vmatpush.msra.mxu0 0.0
        %293 = vmatpush.msra.mxu0 0.0
        %294 = vmatpush.msra.mxu0 0.0
        %295 = vmatpush.msra.mxu0 0.0
        %296 = vmatpush.msra.mxu0 0.0
        %297 = vmatpush.msra.mxu0 0.0
        %298 = vmatpush.msra.mxu0 0.0
        %299 = vmatpush.msra.mxu0 %v286
        %300 = vmatpush.msra.mxu0 %v233
        %301 = vmatpush.msra.mxu0 %v232
        %302 = vmatpush.msra.mxu0 %v231
        %303 = vmatpush.msra.mxu0 %v230
        %304 = vmatmul.f32.gmra.mxu0 %v237
        %v305 = vpop.f32.mrf.mxu0
        %v306 = vadd.f32 0.0, %v305
        %307 = vmatmul.f32.gmra.mxu0 %v240
        %v308 = vpop.f32.mrf.mxu0
        %v309 = vadd.f32 0.0, %v308
        %310 = vmatmul.f32.gmra.mxu0 %v243
        %v311 = vpop.f32.mrf.mxu0
        %v312 = vadd.f32 0.0, %v311
        %313 = vmatmul.f32.gmra.mxu0 %v246
        %v314 = vpop.f32.mrf.mxu0
        %v315 = vadd.f32 0.0, %v314
        %316 = vmatmul.f32.gmra.mxu0 %v249
        %v317 = vpop.f32.mrf.mxu0
        %v318 = vadd.f32 0.0, %v317
        %319 = vmatmul.f32.gmra.mxu0 %v252
        %v320 = vpop.f32.mrf.mxu0
        %v321 = vadd.f32 0.0, %v320
        %322 = vmatmul.f32.gmra.mxu0 %v255
        %v323 = vpop.f32.mrf.mxu0
        %v324 = vadd.f32 0.0, %v323
        %325 = vmatmul.f32.gmra.mxu0 %v258
        %v326 = vpop.f32.mrf.mxu0
        %v327 = vadd.f32 0.0, %v326
        %328 = vmatmul.f32.gmra.mxu0 %v261
        %v329 = vpop.f32.mrf.mxu0
        %v330 = vadd.f32 0.0, %v329
        %331 = vmatmul.f32.gmra.mxu0 %v264
        %v332 = vpop.f32.mrf.mxu0
        %v333 = vadd.f32 0.0, %v332
        %334 = vmatmul.f32.gmra.mxu0 %v267
        %v335 = vpop.f32.mrf.mxu0
        %v336 = vadd.f32 0.0, %v335
        %337 = vmatmul.f32.gmra.mxu0 %v270
        %v338 = vpop.f32.mrf.mxu0
        %v339 = vadd.f32 0.0, %v338
        %340 = vmatmul.f32.gmra.mxu0 %v273
        %v341 = vpop.f32.mrf.mxu0
        %v342 = vadd.f32 0.0, %v341
        %343 = vmatmul.f32.gmra.mxu0 %v276
        %v344 = vpop.f32.mrf.mxu0
        %v345 = vadd.f32 0.0, %v344
        %346 = vmatmul.f32.gmra.mxu0 %v279
        %v347 = vpop.f32.mrf.mxu0
        %v348 = vadd.f32 0.0, %v347
        %349 = vmatmul.f32.gmra.mxu0 %v282
        %v350 = vpop.f32.mrf.mxu0
        %v351 = vadd.f32 0.0, %v350
        %352 = vdwg.mxu0
        %v353 = vmax.f32 %v306, 0.0
        %v354 = vmax.f32 %v309, 0.0
        %v355 = vmax.f32 %v312, 0.0
        %v356 = vmax.f32 %v315, 0.0
        %v357 = vmax.f32 %v318, 0.0
        %v358 = vmax.f32 %v321, 0.0
        %v359 = vmax.f32 %v324, 0.0
        %v360 = vmax.f32 %v327, 0.0
        %v361 = vmax.f32 %v330, 0.0
        %v362 = vmax.f32 %v333, 0.0
        %v363 = vmax.f32 %v336, 0.0
        %v364 = vmax.f32 %v339, 0.0
        %v365 = vmax.f32 %v342, 0.0
        %v366 = vmax.f32 %v345, 0.0
        %v367 = vmax.f32 %v348, 0.0
        %v368 = vmax.f32 %v351, 0.0
        %369 = vst [vmem:[%s206] sm:$0xff] %v353
        %370 = vst [vmem:[%s206 + $0x8] sm:$0xff] %v354
        %371 = vst [vmem:[%s206 + $0x10] sm:$0xff] %v355
        %372 = vst [vmem:[%s206 + $0x18] sm:$0xff] %v356
        %373 = vst [vmem:[%s206 + $0x20] sm:$0xff] %v357
        %374 = vst [vmem:[%s206 + $0x28] sm:$0xff] %v358
        %375 = vst [vmem:[%s206 + $0x30] sm:$0xff] %v359
        %376 = vst [vmem:[%s206 + $0x38] sm:$0xff] %v360
        %377 = vst [vmem:[%s206 + $0x40] sm:$0xff] %v361
        %378 = vst [vmem:[%s206 + $0x48] sm:$0xff] %v362
        %379 = vst [vmem:[%s206 + $0x50] sm:$0xff] %v363
        %380 = vst [vmem:[%s206 + $0x58] sm:$0xff] %v364
        %381 = vst [vmem:[%s206 + $0x60] sm:$0xff] %v365
        %382 = vst [vmem:[%s206 + $0x68] sm:$0xff] %v366
        %383 = vst [vmem:[%s206 + $0x70] sm:$0xff] %v367
        %384 = vst [vmem:[%s206 + $0x78] sm:$0xff] %v368
        %s385 = sand.u32 %s104, 1
        %s386 = scalar_lea.sflag [#allocation4], %s385
        %s387 = sand.u32 %s104, 1
        %s388 = smul.addr %s387, 128
        %s389 = scalar_lea.vmem [#allocation5], %s388
        // Predicated region
        $region33: #{tpu_custom_call.1} parent=27 // pred_check
          %p390 = pneg %p114
        $region34: #{tpu_custom_call.1} parent=27 // pred_check_branch
          %392 = sbr.rel (%p390) target = $region36
        $region35: #{tpu_custom_call.1} parent=27 // pred_region
          %s393 = smul.u32 8, %s26
          %395 = vsyncadd %s386, 0
          %s396 = smul.addr %s393, 2
          %s397 = sadd.s32 %s24, %s396
          %s398 = smul.addr %s25, 32
          %s399 = sadd.s32 %s397, %s398
          %s400 = smul.addr %s399, 8
          %s401 = scalar_lea.hbm %s2, %s400
          %s402 = sshll.u32 %s389, 4
          %s403 = int_to_ptr.vmem [resolvable:$true] %s402
          %s404 = sshll.u32 %s401, 4
          %s405 = int_to_ptr.hbm [resolvable:$true] %s404
          %410 = dma.vmem_to_hbm [thread:$0]  %s403, 2048, %s405, %s386, 128, 128, 8
        $region36: #{tpu_custom_call.1} parent=27 // pred_fallthru
          _
      $region28: #{tpu_custom_call.1} parent=5 // pred_fallthru
        _
      %p411 = scmp.le.s32.totalorder 2, %s14
      // Predicated region
      $region37: #{tpu_custom_call.1} parent=5 // pred_check
        %p412 = pneg %p411
      $region38: #{tpu_custom_call.1} parent=5 // pred_check_branch
        %414 = sbr.rel (%p412) target = $region40
      $region39: #{tpu_custom_call.1} parent=5 // pred_region
        %s415 = ssub.s32 %s14, 2
        // Predicated region
        $region41: #{tpu_custom_call.1} parent=39 // pred_check
          %p416 = pneg %p120
        $region42: #{tpu_custom_call.1} parent=39 // pred_check_branch
          %418 = sbr.rel (%p416) target = $region44
        $region43: #{tpu_custom_call.1} parent=39 // pred_region
          %s419 = sand.u32 %s105, 1
          %s420 = scalar_lea.sflag [#allocation4], %s419
          %s421 = sand.u32 %s105, 1
          %s422 = smul.addr %s421, 128
          %s423 = scalar_lea.vmem [#allocation5], %s422
          %425 = dma.done %s420, 2048
        $region44: #{tpu_custom_call.1} parent=39 // pred_fallthru
          _
      $region40: #{tpu_custom_call.1} parent=5 // pred_fallthru
        _
    $region6: #{tpu_custom_call.1} parent=1 // loop_footer
      %s18 = sadd.s32 1, %s14
    $region7: #{tpu_custom_call.1} parent=1 // loop_footer_branch
      %13 = sbr.rel target = $region3
    $region8: #{tpu_custom_call.1} parent=1 // loop_exit
      _
    %426 = vsyncpa [#allocation3], 1
    %s427 = scalar_lea.sflag [#allocation3], 1
    %428 = vsyncpa %s427, 1
    %429 = vsyncpa [#allocation4], 1
    %s430 = scalar_lea.sflag [#allocation4], 1
    %431 = vsyncpa %s430, 1

</llo_original>
